<compile_context>
chip_gen: v7x
topology: tpu7x:2x2x1
jax: 0.10.0
libtpu: 0.0.40
codegen_flags: <defaults>
</compile_context>

<pallas_src>
import jax
import jax.numpy as jnp
from jax.experimental import pallas as pl
from jax.experimental.pallas import tpu as pltpu

HIDDEN = 32
LANES = 128          # vreg lane width: hidden & output feature axes padded to this
NEG_INF = -1e30      # bias for padded output columns -> exp() == 0 in the softmax


def mcrnet_kernel(x_ref, w1_ref, b1_ref, w2_ref, b2_ref, o_ref):
    # fc1: bf16 MXU matmul, f32 accumulate; bias + relu in f32.
    h = jnp.dot(x_ref[...], w1_ref[...], preferred_element_type=jnp.float32)
    h = jnp.maximum(h + b1_ref[...], 0.0)          # b1 is (1, 128), broadcasts
    # fc2: cast activations back to bf16 for the MXU, accumulate in f32.
    logits = jnp.dot(h.astype(jnp.bfloat16), w2_ref[...],
                     preferred_element_type=jnp.float32)
    logits = logits + b2_ref[...]                  # padded lanes carry -1e30
    # Numerically stable softmax over the lane-dense 128-wide padded axis.
    m = jnp.max(logits, axis=-1, keepdims=True)
    e = jnp.exp(logits - m)
    s = jnp.sum(e, axis=-1, keepdims=True)
    o_ref[...] = e * pl.reciprocal(s, approx=True)


def mcrnet_forward(x, w1, b1, w2, b2, *, tile_b=1024):
    """x: [B, D_in] f32; w1: [D_in, 32]; b1: [1, 32]; w2: [32, D_out]; b2: [1, D_out]."""
    B, D_in = x.shape
    D_out = w2.shape[1]
    assert w1.shape == (D_in, HIDDEN) and b1.shape == (1, HIDDEN)
    assert w2.shape == (HIDDEN, D_out) and b2.shape == (1, D_out)
    assert D_out <= LANES

    # ---- pad feature axes to the full 128-lane vreg width (lane-dense) ----
    w1p = jnp.pad(w1, ((0, 0), (0, LANES - HIDDEN))).astype(jnp.bfloat16)
    b1p = jnp.pad(b1, ((0, 0), (0, LANES - HIDDEN))).astype(jnp.float32)
    w2p = jnp.pad(w2, ((0, LANES - HIDDEN), (0, LANES - D_out))).astype(jnp.bfloat16)
    b2p = jnp.pad(b2, ((0, 0), (0, LANES - D_out)),
                  constant_values=NEG_INF).astype(jnp.float32)

    # ---- tile the batch; pad B up to a multiple of the tile ----
    tb = max(8, min((int(tile_b) // 8) * 8, ((B + 7) // 8) * 8))
    b_pad = pl.cdiv(B, tb) * tb
    xp = jnp.pad(x, ((0, b_pad - B), (0, 0))).astype(jnp.bfloat16)

    bytes_accessed = (b_pad * D_in * 2               # x read (bf16)
                      + D_in * LANES * 2 + LANES * LANES * 2   # weights (bf16)
                      + 2 * LANES * 4                # biases (f32)
                      + b_pad * LANES * 4)           # output write (f32)

    out = pl.pallas_call(
        mcrnet_kernel,
        out_shape=jax.ShapeDtypeStruct((b_pad, LANES), jnp.float32),
        grid_spec=pltpu.PrefetchScalarGridSpec(
            num_scalar_prefetch=0,
            grid=(b_pad // tb,),
            in_specs=[
                pl.BlockSpec((tb, D_in), lambda i: (i, 0)),       # x: tiled on batch
                pl.BlockSpec((D_in, LANES), lambda i: (0, 0)),    # w1: VMEM-resident
                pl.BlockSpec((1, LANES), lambda i: (0, 0)),       # b1: VMEM-resident
                pl.BlockSpec((LANES, LANES), lambda i: (0, 0)),   # w2: VMEM-resident
                pl.BlockSpec((1, LANES), lambda i: (0, 0)),       # b2: VMEM-resident
            ],
            out_specs=pl.BlockSpec((tb, LANES), lambda i: (i, 0)),
        ),
        compiler_params=pltpu.CompilerParams(
            dimension_semantics=("parallel",),
            vmem_limit_bytes=32 * 1024 * 1024,
        ),
        cost_estimate=pl.CostEstimate(
            flops=2 * b_pad * LANES * (D_in + LANES),
            transcendentals=b_pad * LANES,
            bytes_accessed=bytes_accessed,
        ),
    )(xp, w1p, b1p, w2p, b2p)

    # Drop padded batch rows and padded output lanes.
    return out[:B, :D_out]


def xavier_uniform(key, fan_in, fan_out):
    # matches torch.nn.init.xavier_uniform_ (gain=1.0)
    limit = jnp.sqrt(6.0 / (fan_in + fan_out))
    # produce weight in [out, in] like PyTorch, then transpose for kernel layout
    w = jax.random.uniform(key, (fan_out, fan_in), minval=-limit, maxval=limit,
                           dtype=jnp.float32)
    return w.T  # [in, out]


def init_params(key, input_dim, output_dim):
    k1, k2, k3, k4 = jax.random.split(key, 4)
    w1 = xavier_uniform(k1, input_dim, HIDDEN)            # [input_dim, 32]
    w2 = xavier_uniform(k2, HIDDEN, output_dim)           # [32, output_dim]
    # PyTorch Linear default bias init: U(-1/sqrt(fan_in), 1/sqrt(fan_in))
    b1_bound = 1.0 / jnp.sqrt(jnp.float32(input_dim))
    b2_bound = 1.0 / jnp.sqrt(jnp.float32(HIDDEN))
    b1 = jax.random.uniform(k3, (1, HIDDEN), minval=-b1_bound, maxval=b1_bound,
                            dtype=jnp.float32)
    b2 = jax.random.uniform(k4, (1, output_dim), minval=-b2_bound, maxval=b2_bound,
                            dtype=jnp.float32)
    return w1, b1, w2, b2


def reference_forward(x, w1, b1, w2, b2):
    h = jnp.maximum(x @ w1 + b1, 0.0)
    logits = h @ w2 + b2
    return jax.nn.softmax(logits, axis=-1)


if __name__ == "__main__":
    key = jax.random.PRNGKey(0)
    kx, kp = jax.random.split(key)

    batch, input_dim, output_dim = 64, 16, 8
    x = jax.random.normal(kx, (batch, input_dim), dtype=jnp.float32)
    w1, b1, w2, b2 = init_params(kp, input_dim, output_dim)

    # tile_b=32 -> grid of 2 batch tiles, exercising the parallel grid path.
    out = mcrnet_forward(x, w1, b1, w2, b2, tile_b=32)
    out = jax.block_until_ready(out)

    ref = reference_forward(x, w1, b1, w2, b2)
    assert out.shape == (batch, output_dim)
    # bf16 MXU matmuls + EUP approx reciprocal -> loose tolerance vs f32 reference.
    assert jnp.allclose(out, ref, atol=3e-2, rtol=3e-2), float(jnp.max(jnp.abs(out - ref)))
    assert jnp.allclose(jnp.sum(out, axis=-1), 1.0, atol=1e-2)

    print("KERNEL_OK")
</pallas_src>

<mosaic_0001>
module attributes {stable_mosaic.version = 11 : i64} {
  func.func @mcrnet_kernel(%arg0: i32, %arg1: memref<32x16xbf16, #tpu.memory_space<vmem>>, %arg2: memref<16x128xbf16, #tpu.memory_space<vmem>>, %arg3: memref<1x128xf32, #tpu.memory_space<vmem>>, %arg4: memref<128x128xbf16, #tpu.memory_space<vmem>>, %arg5: memref<1x128xf32, #tpu.memory_space<vmem>>, %arg6: memref<32x128xf32, #tpu.memory_space<vmem>>) attributes {dimension_semantics = [#tpu.dimension_semantics<parallel>], iteration_bounds = array<i64: 2>, scalar_prefetch = 0 : i64, scratch_operands = 0 : i64, tpu.core_type = #tpu.core_type<tc>, window_params = [{transform_indices = @transform_0, window_bounds = array<i64: 32, 16>}, {pipeline_mode = #tpu.pipeline_mode<synchronous>, transform_indices = @transform_1, window_bounds = array<i64: 16, 128>}, {pipeline_mode = #tpu.pipeline_mode<synchronous>, transform_indices = @transform_2, window_bounds = array<i64: 1, 128>}, {pipeline_mode = #tpu.pipeline_mode<synchronous>, transform_indices = @transform_3, window_bounds = array<i64: 128, 128>}, {pipeline_mode = #tpu.pipeline_mode<synchronous>, transform_indices = @transform_4, window_bounds = array<i64: 1, 128>}, {transform_indices = @transform_5, window_bounds = array<i64: 32, 128>}]} {
    %c0 = arith.constant 0 : index
    %c0_0 = arith.constant 0 : index
    %0 = vector.load %arg1[%c0, %c0_0] : memref<32x16xbf16, #tpu.memory_space<vmem>>, vector<32x16xbf16>
    %c0_1 = arith.constant 0 : index
    %c0_2 = arith.constant 0 : index
    %1 = vector.load %arg2[%c0_1, %c0_2] : memref<16x128xbf16, #tpu.memory_space<vmem>>, vector<16x128xbf16>
    %cst = arith.constant dense<0.000000e+00> : vector<32x128xf32>
    %2 = tpu.matmul %0, %1, %cst {dimension_numbers = #tpu.dot_dimension_numbers<[1], [0], [0], [1], [0, 0, 1, 1], [], []>} : vector<32x16xbf16>, vector<16x128xbf16>, vector<32x128xf32> -> vector<32x128xf32>
    %c0_3 = arith.constant 0 : index
    %c0_4 = arith.constant 0 : index
    %3 = vector.load %arg3[%c0_3, %c0_4] : memref<1x128xf32, #tpu.memory_space<vmem>>, vector<1x128xf32>
    %4 = vector.broadcast %3 : vector<1x128xf32> to vector<32x128xf32>
    %5 = arith.addf %2, %4 : vector<32x128xf32>
    %cst_5 = arith.constant 0.000000e+00 : f32
    %6 = vector.broadcast %cst_5 : f32 to vector<32x128xf32>
    %7 = arith.maximumf %5, %6 : vector<32x128xf32>
    %8 = arith.truncf %7 : vector<32x128xf32> to vector<32x128xbf16>
    %c0_6 = arith.constant 0 : index
    %c0_7 = arith.constant 0 : index
    %9 = vector.load %arg4[%c0_6, %c0_7] : memref<128x128xbf16, #tpu.memory_space<vmem>>, vector<128x128xbf16>
    %cst_8 = arith.constant dense<0.000000e+00> : vector<32x128xf32>
    %10 = tpu.matmul %8, %9, %cst_8 {dimension_numbers = #tpu.dot_dimension_numbers<[1], [0], [0], [1], [0, 0, 1, 1], [], []>} : vector<32x128xbf16>, vector<128x128xbf16>, vector<32x128xf32> -> vector<32x128xf32>
    %c0_9 = arith.constant 0 : index
    %c0_10 = arith.constant 0 : index
    %11 = vector.load %arg5[%c0_9, %c0_10] : memref<1x128xf32, #tpu.memory_space<vmem>>, vector<1x128xf32>
    %12 = vector.broadcast %11 : vector<1x128xf32> to vector<32x128xf32>
    %13 = arith.addf %10, %12 : vector<32x128xf32>
    %cst_11 = arith.constant dense<0xFF800000> : vector<32xf32>
    %14 = vector.multi_reduction <maximumf>, %13, %cst_11 [1] : vector<32x128xf32> to vector<32xf32>
    %15 = vector.shape_cast %14 : vector<32xf32> to vector<32x1xf32>
    %16 = vector.broadcast %15 : vector<32x1xf32> to vector<32x128xf32>
    %17 = arith.subf %13, %16 : vector<32x128xf32>
    %18 = math.exp %17 : vector<32x128xf32>
    %cst_12 = arith.constant dense<0.000000e+00> : vector<32xf32>
    %19 = vector.multi_reduction <add>, %18, %cst_12 [1] : vector<32x128xf32> to vector<32xf32>
    %20 = vector.shape_cast %19 : vector<32xf32> to vector<32x1xf32>
    %21 = tpu.reciprocal %20 {approx = true} : vector<32x1xf32> -> vector<32x1xf32>
    %22 = vector.broadcast %21 : vector<32x1xf32> to vector<32x128xf32>
    %23 = arith.mulf %18, %22 : vector<32x128xf32>
    %c0_13 = arith.constant 0 : index
    %c0_14 = arith.constant 0 : index
    %24 = vector.load %arg6[%c0_13, %c0_14] : memref<32x128xf32, #tpu.memory_space<vmem>>, vector<32x128xf32>
    tpu.vector_store %arg6[%c0_13, %c0_14], %23 {strides = array<i32>} : memref<32x128xf32, #tpu.memory_space<vmem>>, vector<32x128xf32>,
    return
  }
  func.func @transform_0(%arg0: i32) -> (i32, i32) {
    %c0_i32 = arith.constant 0 : i32
    %c0_i32_0 = arith.constant 0 : i32
    return %arg0, %c0_i32 : i32, i32
  }
  func.func @transform_1(%arg0: i32) -> (i32, i32) {
    %c0_i32 = arith.constant 0 : i32
    %c0_i32_0 = arith.constant 0 : i32
    %c0_i32_1 = arith.constant 0 : i32
    return %c0_i32, %c0_i32_0 : i32, i32
  }
  func.func @transform_2(%arg0: i32) -> (i32, i32) {
    %c0_i32 = arith.constant 0 : i32
    %c0_i32_0 = arith.constant 0 : i32
    %c0_i32_1 = arith.constant 0 : i32
    return %c0_i32, %c0_i32_0 : i32, i32
  }
  func.func @transform_3(%arg0: i32) -> (i32, i32) {
    %c0_i32 = arith.constant 0 : i32
    %c0_i32_0 = arith.constant 0 : i32
    %c0_i32_1 = arith.constant 0 : i32
    return %c0_i32, %c0_i32_0 : i32, i32
  }
  func.func @transform_4(%arg0: i32) -> (i32, i32) {
    %c0_i32 = arith.constant 0 : i32
    %c0_i32_0 = arith.constant 0 : i32
    %c0_i32_1 = arith.constant 0 : i32
    return %c0_i32, %c0_i32_0 : i32, i32
  }
  func.func @transform_5(%arg0: i32) -> (i32, i32) {
    %c0_i32 = arith.constant 0 : i32
    %c0_i32_0 = arith.constant 0 : i32
    return %arg0, %c0_i32 : i32, i32
  }
}

</mosaic_0001>

<llo_original>
// kernel: tpu_custom_call.1
$region0: #{tpu_custom_call.1}
  #allocation0 [shape = 'u32[]', space=smem, size = 0x4, offset = 0x4, fixed_abs, tag = 'smem constant byte address 0x4 - core index']
  #allocation1 [shape = 'u32[144,128]{1,0:T(1,128)}', space=vmem, size = 0x12000, scoped, tag = 'internal scratch']
  %s0 = inlined_call_operand.vmem [shape: bf16[64,16], index: 0, kind: input, shape index: {}]
  %s1 = inlined_call_operand.vmem [shape: bf16[16,128], index: 1, kind: input, shape index: {}]
  %s2 = inlined_call_operand.vmem [shape: f32[1,128], index: 2, kind: input, shape index: {}]
  %s3 = inlined_call_operand.hbm [shape: bf16[128,128], index: 3, kind: input, shape index: {}]
  %s4 = inlined_call_operand.vmem [shape: f32[1,128], index: 4, kind: input, shape index: {}]
  %s5 = inlined_call_operand.hbm [shape: f32[64,128], index: 5, kind: output, shape index: {}]
  %s6 = sld [smem:[#allocation0]]
  $region57: #{tpu_custom_call.1} parent=0
    _
  %s8 = ssub.s32 1, %s6
  %s9 = scalar_select 0, %s8, %s6
  $region1: #{tpu_custom_call.1} parent=0
    #allocation2 [shape = 'u8[32768]{0}', space=vmem, size = 0x8000, scoped, tag = 'input window, operand 3, single buffered']
    #allocation3 [shape = 's32[2]{0}', space=sflag, size = 0x8, scoped, tag = 'scoped memory for tpu_custom_call.1']
    #allocation4 [shape = 's32[2]{0}', space=sflag, size = 0x8, scoped, tag = 'scoped memory for tpu_custom_call.1']
    #allocation5 [shape = 'u8[32768]{0}', space=vmem, size = 0x8000, scoped, tag = 'output window, operand 0']
    %10 = vsyncpa [#allocation3], 0
    %11 = vsyncpa [#allocation4], 0
    %s12 = scalar_lea.sflag [#allocation4], 1
    %13 = vsyncpa %s12, 0
    loop: start=0, step=1, limit=4
    $region2: #{tpu_custom_call.1} parent=1 // loop_pre_header
      _
    $region3: #{tpu_custom_call.1} parent=1 // loop_header
      %s15 = sphi 0, %s19
      %p16 = scmp.ge.s32.totalorder %s15, 4
      %s25 = sphi 0, %s27
      %s28 = sphi 0, %s25
      %s29 = sphi 0, %s28
      %s45 = sphi 0, %s29
      %s49 = sphi 0, %s49
      %s51 = sphi 0, %s49
      %s52 = sphi 0, %s51
      %s66 = sphi 0, %s52
      %s70 = sphi 0, %s70
      %s72 = sphi 0, %s70
      %s73 = sphi 0, %s72
      %s87 = sphi 0, %s73
      %s91 = sphi 0, %s91
      %s93 = sphi 0, %s91
      %s94 = sphi 0, %s93
      %s108 = sphi 0, %s94
      %s112 = sphi 0, %s112
      %s114 = sphi 0, %s112
      %s115 = sphi 0, %s114
      %s129 = sphi 0, %s115
      %s135 = sphi 0, %s137
      %s138 = sphi 0, %s135
      %s139 = sphi 0, %s138
      %s155 = sphi 0, %s139
    $region4: #{tpu_custom_call.1} parent=1 // loop_header_branch
      %18 = sbr.rel (%p16) target = $region8
    $region5: #{tpu_custom_call.1} parent=1 // loop_body
      %s20 = ssub.s32 %s15, 1
      %s21 = ssub.s32 %s15, 2
      %s22 = sadd.s32 %s15, 1
      %s23 = ssub.s32 %s15, %s22
      %p24 = scmp.eq.s32.totalorder %s23, 0
      %s26 = sadd.s32 %s25, 1
      %s27 = scalar_select %p24, %s25, %s26
      %p30 = pneg %p24
      %p31 = scmp.eq.s32.totalorder %s15, 1
      %p32 = por %p30, %p31
      %p33 = scmp.ne.s32.totalorder %s25, %s28
      %p34 = scmp.eq.s32.totalorder %s15, 0
      %p35 = por %p33, %p34
      %p36 = scmp.ne.s32.totalorder %s25, %s28
      %p37 = scmp.eq.s32.totalorder %s20, 1
      %p38 = por %p36, %p37
      %p39 = scmp.ne.s32.totalorder %s28, %s29
      %p40 = scmp.eq.s32.totalorder %s20, 0
      %p41 = por %p39, %p40
      %p42 = scmp.ne.s32.totalorder %s28, %s29
      %p43 = scmp.eq.s32.totalorder %s21, 1
      %p44 = por %p42, %p43
      %p46 = scmp.ne.s32.totalorder %s29, %s45
      %p47 = scmp.eq.s32.totalorder %s21, 0
      %p48 = por %p46, %p47
      %s50 = sadd.s32 %s49, 1
      %p53 = scmp.eq.s32.totalorder %s15, 1
      %p54 = scmp.ne.s32.totalorder %s49, %s51
      %p55 = scmp.eq.s32.totalorder %s15, 0
      %p56 = por %p54, %p55
      %p57 = scmp.ne.s32.totalorder %s49, %s51
      %p58 = scmp.eq.s32.totalorder %s20, 1
      %p59 = por %p57, %p58
      %p60 = scmp.ne.s32.totalorder %s51, %s52
      %p61 = scmp.eq.s32.totalorder %s20, 0
      %p62 = por %p60, %p61
      %p63 = scmp.ne.s32.totalorder %s51, %s52
      %p64 = scmp.eq.s32.totalorder %s21, 1
      %p65 = por %p63, %p64
      %p67 = scmp.ne.s32.totalorder %s52, %s66
      %p68 = scmp.eq.s32.totalorder %s21, 0
      %p69 = por %p67, %p68
      %s71 = sadd.s32 %s70, 1
      %p74 = scmp.eq.s32.totalorder %s15, 1
      %p75 = scmp.ne.s32.totalorder %s70, %s72
      %p76 = scmp.eq.s32.totalorder %s15, 0
      %p77 = por %p75, %p76
      %p78 = scmp.ne.s32.totalorder %s70, %s72
      %p79 = scmp.eq.s32.totalorder %s20, 1
      %p80 = por %p78, %p79
      %p81 = scmp.ne.s32.totalorder %s72, %s73
      %p82 = scmp.eq.s32.totalorder %s20, 0
      %p83 = por %p81, %p82
      %p84 = scmp.ne.s32.totalorder %s72, %s73
      %p85 = scmp.eq.s32.totalorder %s21, 1
      %p86 = por %p84, %p85
      %p88 = scmp.ne.s32.totalorder %s73, %s87
      %p89 = scmp.eq.s32.totalorder %s21, 0
      %p90 = por %p88, %p89
      %s92 = sadd.s32 %s91, 1
      %p95 = scmp.eq.s32.totalorder %s15, 1
      %p96 = scmp.ne.s32.totalorder %s91, %s93
      %p97 = scmp.eq.s32.totalorder %s15, 0
      %p98 = por %p96, %p97
      %p99 = scmp.ne.s32.totalorder %s91, %s93
      %p100 = scmp.eq.s32.totalorder %s20, 1
      %p101 = por %p99, %p100
      %p102 = scmp.ne.s32.totalorder %s93, %s94
      %p103 = scmp.eq.s32.totalorder %s20, 0
      %p104 = por %p102, %p103
      %p105 = scmp.ne.s32.totalorder %s93, %s94
      %p106 = scmp.eq.s32.totalorder %s21, 1
      %p107 = por %p105, %p106
      %p109 = scmp.ne.s32.totalorder %s94, %s108
      %p110 = scmp.eq.s32.totalorder %s21, 0
      %p111 = por %p109, %p110
      %s113 = sadd.s32 %s112, 1
      %p116 = scmp.eq.s32.totalorder %s15, 1
      %p117 = scmp.ne.s32.totalorder %s112, %s114
      %p118 = scmp.eq.s32.totalorder %s15, 0
      %p119 = por %p117, %p118
      %p120 = scmp.ne.s32.totalorder %s112, %s114
      %p121 = scmp.eq.s32.totalorder %s20, 1
      %p122 = por %p120, %p121
      %p123 = scmp.ne.s32.totalorder %s114, %s115
      %p124 = scmp.eq.s32.totalorder %s20, 0
      %p125 = por %p123, %p124
      %p126 = scmp.ne.s32.totalorder %s114, %s115
      %p127 = scmp.eq.s32.totalorder %s21, 1
      %p128 = por %p126, %p127
      %p130 = scmp.ne.s32.totalorder %s115, %s129
      %p131 = scmp.eq.s32.totalorder %s21, 0
      %p132 = por %p130, %p131
      %s133 = ssub.s32 %s15, %s22
      %p134 = scmp.eq.s32.totalorder %s133, 0
      %s136 = sadd.s32 %s135, 1
      %s137 = scalar_select %p134, %s135, %s136
      %p140 = pneg %p134
      %p141 = scmp.eq.s32.totalorder %s15, 1
      %p142 = por %p140, %p141
      %p143 = scmp.ne.s32.totalorder %s135, %s138
      %p144 = scmp.eq.s32.totalorder %s15, 0
      %p145 = por %p143, %p144
      %p146 = scmp.ne.s32.totalorder %s135, %s138
      %p147 = scmp.eq.s32.totalorder %s20, 1
      %p148 = por %p146, %p147
      %p149 = scmp.ne.s32.totalorder %s138, %s139
      %p150 = scmp.eq.s32.totalorder %s20, 0
      %p151 = por %p149, %p150
      %p152 = scmp.ne.s32.totalorder %s138, %s139
      %p153 = scmp.eq.s32.totalorder %s21, 1
      %p154 = por %p152, %p153
      %p156 = scmp.ne.s32.totalorder %s139, %s155
      %p157 = scmp.eq.s32.totalorder %s21, 0
      %p158 = por %p156, %p157
      %p159 = scmp.le.s32.totalorder 1, %s15
      %p160 = scmp.lt.s32.totalorder %s15, 3
      %p161 = pnand %p159, %p160
      %p162 = pneg %p161
      // Predicated region
      $region9: #{tpu_custom_call.1} parent=5 // pred_check
        _
      $region10: #{tpu_custom_call.1} parent=5 // pred_check_branch
        %164 = sbr.rel (%p161) target = $region12
      $region11: #{tpu_custom_call.1} parent=5 // pred_region
        %s165 = ssub.s32 %s15, 1
        // Predicated region
        $region13: #{tpu_custom_call.1} parent=11 // pred_check
          %p166 = pneg %p62
        $region14: #{tpu_custom_call.1} parent=11 // pred_check_branch
          %168 = sbr.rel (%p166) target = $region16
        $region15: #{tpu_custom_call.1} parent=11 // pred_region
          _
        $region16: #{tpu_custom_call.1} parent=11 // pred_fallthru
          _
        // Predicated region
        $region17: #{tpu_custom_call.1} parent=11 // pred_check
          %p169 = pneg %p83
        $region18: #{tpu_custom_call.1} parent=11 // pred_check_branch
          %171 = sbr.rel (%p169) target = $region20
        $region19: #{tpu_custom_call.1} parent=11 // pred_region
          _
        $region20: #{tpu_custom_call.1} parent=11 // pred_fallthru
          _
        // Predicated region
        $region21: #{tpu_custom_call.1} parent=11 // pred_check
          %p172 = pneg %p104
        $region22: #{tpu_custom_call.1} parent=11 // pred_check_branch
          %174 = sbr.rel (%p172) target = $region24
        $region23: #{tpu_custom_call.1} parent=11 // pred_region
          %s176 = ssub.s32 1024, 1024
          %177 = vsyncadd [#allocation3], %s176
          %s178 = sshll.u32 [#allocation2], 4
          %s179 = int_to_ptr.vmem [resolvable:$true] %s178
          %184 = dma.hbm_to_vmem [thread:$0]  %s3, 1024, %s179, [#allocation3], 64, 64, 4
        $region24: #{tpu_custom_call.1} parent=11 // pred_fallthru
          _
        // Predicated region
        $region25: #{tpu_custom_call.1} parent=11 // pred_check
          %p185 = pneg %p125
        $region26: #{tpu_custom_call.1} parent=11 // pred_check_branch
          %187 = sbr.rel (%p185) target = $region28
        $region27: #{tpu_custom_call.1} parent=11 // pred_region
          _
        $region28: #{tpu_custom_call.1} parent=11 // pred_fallthru
          _
      $region12: #{tpu_custom_call.1} parent=5 // pred_fallthru
        _
      %p188 = scmp.lt.s32.totalorder %s15, 2
      // Predicated region
      $region29: #{tpu_custom_call.1} parent=5 // pred_check
        %p189 = pneg %p188
      $region30: #{tpu_custom_call.1} parent=5 // pred_check_branch
        %191 = sbr.rel (%p189) target = $region32
      $region31: #{tpu_custom_call.1} parent=5 // pred_region
        // Predicated region
        $region33: #{tpu_custom_call.1} parent=31 // pred_check
          %p192 = pneg %p35
        $region34: #{tpu_custom_call.1} parent=31 // pred_check_branch
          %194 = sbr.rel (%p192) target = $region36
        $region35: #{tpu_custom_call.1} parent=31 // pred_region
          %s195 = smul.u32 4, %s15
          %p196 = scmp.lt.s32.totalorder %s195, 7
          %s197 = scalar_select %p196, %s195, 7
          %s198 = smul.addr %s197, 4
          %s199 = scalar_lea.vmem %s0, %s198
          %s200 = smul.u32 4, %s15
        $region36: #{tpu_custom_call.1} parent=31 // pred_fallthru
          _
      $region32: #{tpu_custom_call.1} parent=5 // pred_fallthru
        _
      %p201 = scmp.le.s32.totalorder 1, %s15
      %p202 = scmp.lt.s32.totalorder %s15, 3
      %p203 = pnand %p201, %p202
      %p204 = pneg %p203
      // Predicated region
      $region37: #{tpu_custom_call.1} parent=5 // pred_check
        _
      $region38: #{tpu_custom_call.1} parent=5 // pred_check_branch
        %206 = sbr.rel (%p203) target = $region40
      $region39: #{tpu_custom_call.1} parent=5 // pred_region
        %s207 = ssub.s32 %s15, 1
        // Predicated region
        $region41: #{tpu_custom_call.1} parent=39 // pred_check
          %p208 = pneg %p104
        $region42: #{tpu_custom_call.1} parent=39 // pred_check_branch
          %210 = sbr.rel (%p208) target = $region44
        $region43: #{tpu_custom_call.1} parent=39 // pred_region
          %211 = dma.done [#allocation3], 1024
        $region44: #{tpu_custom_call.1} parent=39 // pred_fallthru
          _
        %s212 = smul.u32 4, %s20
        %p213 = scmp.lt.s32.totalorder %s212, 7
        %s214 = scalar_select %p213, %s212, 7
        %s215 = smul.addr %s214, 4
        %s216 = scalar_lea.vmem %s0, %s215
        %p217 = pneg %p41
        %p218 = pneg %p38
        %p219 = pneg %p62
        %p220 = pneg %p59
        %p221 = pneg %p83
        %p222 = pneg %p80
        %p223 = pneg %p104
        %p224 = pneg %p101
        %p225 = pneg %p125
        %p226 = pneg %p122
        %p227 = pneg %p151
        %p228 = pneg %p148
        %s229 = sand.u32 %s138, 1
        %s230 = scalar_lea.sflag [#allocation4], %s229
        %s231 = sand.u32 %s138, 1
        %s232 = smul.addr %s231, 32
        %s233 = scalar_lea.vmem [#allocation5], %s232
        %s234 = smul.u32 4, %s20
        %p235 = scmp.lt.s32.totalorder %s234, 7
        %s236 = scalar_select %p235, %s234, 7
        %s237 = smul.addr %s236, 4
        %s238 = scalar_lea.vmem %s0, %s237
        %s239 = smul.u32 4, %s20
        %s240 = smul.u32 4, %s20
        %v242 = vld [vmem:[%s238] sm:$0xf]
        %v243 = vld [vmem:[%s238 + $0x4] sm:$0xf]
        %v244 = vld [vmem:[%s238 + $0x8] sm:$0xf]
        %v245 = vld [vmem:[%s238 + $0xc] sm:$0xf]
        %v246 = vld [vmem:[%s1] sm:$0xf]
        %v247 = vld [vmem:[%s1 + $0x4] sm:$0xf]
        %v248 = vld [vmem:[%s2] sm:$0x1]
        %v250 = vlaneseq
        %v251 = vshrl.u32 %v250, 7
        %v252 = vsub.s32 0, %v251
        %v253 = vrot.slane %v248, %v252
        %v259 = vunpack.c.l.b16 %v242
        %v260 = vunpack.c.l.b16 %v243
        %v261 = vunpack.c.l.b16 %v244
        %v262 = vunpack.c.l.b16 %v245
        %v263 = vpack.c.b16 %v260, %v259
        %v264 = vpack.c.b16 %v262, %v261
        %v267 = vunpack.c.l.b16 %v246
        %v268 = vunpack.c.l.b16 %v247
        %v269 = vpack.c.b16 %v268, %v267
        %vm271 = vcmask 130048
        %v273 = vsel %vm271, %v263, 0
        %v276 = vsel %vm271, %v264, 0
        %278 = vmatprep.subr.bf16.mxu0 0
        %279 = vmatpush1.bf16.msra.mxu0 %v269
        %280 = vmatprep.subr.bf16.mxu0 0
        %281 = vmatpush1.bf16.msra.mxu0 0
        %282 = vmatprep.subr.bf16.mxu0 0
        %283 = vmatpush1.bf16.msra.mxu0 0
        %284 = vmatprep.subr.bf16.mxu0 0
        %285 = vmatpush1.bf16.msra.mxu0 0
        %286 = vmatprep.subr.bf16.mxu0 0
        %287 = vmatpush1.bf16.msra.mxu0 0
        %288 = vmatprep.subr.bf16.mxu0 0
        %289 = vmatpush1.bf16.msra.mxu0 0
        %290 = vmatprep.subr.bf16.mxu0 0
        %291 = vmatpush1.bf16.msra.mxu0 0
        %292 = vmatprep.subr.bf16.mxu0 0
        %293 = vmatpush1.bf16.msra.mxu0 0
        %294 = vmatprep.subr.bf16.mxu0 0
        %295 = vmatpush1.bf16.msra.mxu0 0
        %296 = vmatprep.subr.bf16.mxu0 0
        %297 = vmatpush1.bf16.msra.mxu0 0
        %298 = vmatprep.subr.bf16.mxu0 0
        %299 = vmatpush1.bf16.msra.mxu0 0
        %300 = vmatprep.subr.bf16.mxu0 0
        %301 = vmatpush1.bf16.msra.mxu0 0
        %302 = vmatprep.subr.bf16.mxu0 0
        %303 = vmatpush1.bf16.msra.mxu0 0
        %304 = vmatprep.subr.bf16.mxu0 0
        %305 = vmatpush1.bf16.msra.mxu0 0
        %306 = vmatprep.subr.bf16.mxu0 0
        %307 = vmatpush1.bf16.msra.mxu0 0
        %308 = vmatprep.subr.bf16.mxu0 0
        %309 = vmatpush1.bf16.msra.mxu0 0
        %310 = vmatprep.mubr.bf16.mxu0 0
        %311 = vmatmul.mubr.bf16.gmra.mrb[0].mxu0 %v273
        %v312 = vpop.f32.mrb[0].mxu0
        %v313 = vadd.f32 %v253, %v312
        %v314 = vpop.f32.mrb[0].mxu0
        %v315 = vpop.f32.mrb[0].mxu0
        %v316 = vadd.f32 %v253, %v315
        %v317 = vpop.f32.mrb[0].mxu0
        %318 = vmatprep.mubr.bf16.mxu0 0
        %319 = vmatmul.mubr.bf16.gmra.mrb[0].mxu0 %v276
        %v320 = vpop.f32.mrb[0].mxu0
        %v321 = vadd.f32 %v253, %v320
        %v322 = vpop.f32.mrb[0].mxu0
        %v323 = vpop.f32.mrb[0].mxu0
        %v324 = vadd.f32 %v253, %v323
        %v325 = vpop.f32.mrb[0].mxu0
        %326 = vdwg.mxu0
        %v327 = vmax.f32 %v313, 0.0
        %v328 = vmax.f32 %v316, 0.0
        %v329 = vmax.f32 %v321, 0.0
        %v330 = vmax.f32 %v324, 0.0
        %v331 = vpack.c.bf16 %v328, %v327
        %v332 = vpack.c.bf16 %v330, %v329
        %v333 = vld [vmem:[#allocation2] sm:$0xf]
        %v334 = vld [vmem:[#allocation2 + $0x4] sm:$0xf]
        %v335 = vld [vmem:[#allocation2 + $0x8] sm:$0xf]
        %v336 = vld [vmem:[#allocation2 + $0xc] sm:$0xf]
        %v337 = vld [vmem:[#allocation2 + $0x10] sm:$0xf]
        %v338 = vld [vmem:[#allocation2 + $0x14] sm:$0xf]
        %v339 = vld [vmem:[#allocation2 + $0x18] sm:$0xf]
        %v340 = vld [vmem:[#allocation2 + $0x1c] sm:$0xf]
        %v341 = vld [vmem:[#allocation2 + $0x20] sm:$0xf]
        %v342 = vld [vmem:[#allocation2 + $0x24] sm:$0xf]
        %v343 = vld [vmem:[#allocation2 + $0x28] sm:$0xf]
        %v344 = vld [vmem:[#allocation2 + $0x2c] sm:$0xf]
        %v345 = vld [vmem:[#allocation2 + $0x30] sm:$0xf]
        %v346 = vld [vmem:[#allocation2 + $0x34] sm:$0xf]
        %v347 = vld [vmem:[#allocation2 + $0x38] sm:$0xf]
        %v348 = vld [vmem:[#allocation2 + $0x3c] sm:$0xf]
        %v349 = vld [vmem:[%s4] sm:$0x1]
        %v351 = vlaneseq
        %v352 = vshrl.u32 %v351, 7
        %v353 = vsub.s32 0, %v352
        %v354 = vrot.slane %v349, %v353
        %v372 = vunpack.c.l.b16 %v333
        %v373 = vunpack.c.l.b16 %v334
        %v374 = vunpack.c.l.b16 %v335
        %v375 = vunpack.c.l.b16 %v336
        %v376 = vunpack.c.l.b16 %v337
        %v377 = vunpack.c.l.b16 %v338
        %v378 = vunpack.c.l.b16 %v339
        %v379 = vunpack.c.l.b16 %v340
        %v380 = vunpack.c.l.b16 %v341
        %v381 = vunpack.c.l.b16 %v342
        %v382 = vunpack.c.l.b16 %v343
        %v383 = vunpack.c.l.b16 %v344
        %v384 = vunpack.c.l.b16 %v345
        %v385 = vunpack.c.l.b16 %v346
        %v386 = vunpack.c.l.b16 %v347
        %v387 = vunpack.c.l.b16 %v348
        %v388 = vpack.c.b16 %v373, %v372
        %v389 = vpack.c.b16 %v375, %v374
        %v390 = vpack.c.b16 %v377, %v376
        %v391 = vpack.c.b16 %v379, %v378
        %v392 = vpack.c.b16 %v381, %v380
        %v393 = vpack.c.b16 %v383, %v382
        %v394 = vpack.c.b16 %v385, %v384
        %v395 = vpack.c.b16 %v387, %v386
        %404 = vmatprep.subr.bf16.mxu0 0
        %405 = vmatpush1.bf16.msra.mxu0 %v388
        %406 = vmatprep.subr.bf16.mxu0 0
        %407 = vmatpush1.bf16.msra.mxu0 %v389
        %408 = vmatprep.subr.bf16.mxu0 0
        %409 = vmatpush1.bf16.msra.mxu0 %v390
        %410 = vmatprep.subr.bf16.mxu0 0
        %411 = vmatpush1.bf16.msra.mxu0 %v391
        %412 = vmatprep.subr.bf16.mxu0 0
        %413 = vmatpush1.bf16.msra.mxu0 %v392
        %414 = vmatprep.subr.bf16.mxu0 0
        %415 = vmatpush1.bf16.msra.mxu0 %v393
        %416 = vmatprep.subr.bf16.mxu0 0
        %417 = vmatpush1.bf16.msra.mxu0 %v394
        %418 = vmatprep.subr.bf16.mxu0 0
        %419 = vmatpush1.bf16.msra.mxu0 %v395
        %420 = vmatprep.subr.bf16.mxu0 0
        %421 = vmatpush1.bf16.msra.mxu0 0
        %422 = vmatprep.subr.bf16.mxu0 0
        %423 = vmatpush1.bf16.msra.mxu0 0
        %424 = vmatprep.subr.bf16.mxu0 0
        %425 = vmatpush1.bf16.msra.mxu0 0
        %426 = vmatprep.subr.bf16.mxu0 0
        %427 = vmatpush1.bf16.msra.mxu0 0
        %428 = vmatprep.subr.bf16.mxu0 0
        %429 = vmatpush1.bf16.msra.mxu0 0
        %430 = vmatprep.subr.bf16.mxu0 0
        %431 = vmatpush1.bf16.msra.mxu0 0
        %432 = vmatprep.subr.bf16.mxu0 0
        %433 = vmatpush1.bf16.msra.mxu0 0
        %434 = vmatprep.subr.bf16.mxu0 0
        %435 = vmatpush1.bf16.msra.mxu0 0
        %436 = vmatprep.mubr.bf16.mxu0 0
        %437 = vmatmul.mubr.bf16.gmra.mrb[0].mxu0 %v331
        %v438 = vpop.f32.mrb[0].mxu0
        %v439 = vadd.f32 %v354, %v438
        %v440 = vpop.f32.mrb[0].mxu0
        %v441 = vpop.f32.mrb[0].mxu0
        %v442 = vadd.f32 %v354, %v441
        %v443 = vpop.f32.mrb[0].mxu0
        %444 = vmatprep.mubr.bf16.mxu0 0
        %445 = vmatmul.mubr.bf16.gmra.mrb[0].mxu0 %v332
        %v446 = vpop.f32.mrb[0].mxu0
        %v447 = vadd.f32 %v354, %v446
        %v448 = vpop.f32.mrb[0].mxu0
        %v449 = vpop.f32.mrb[0].mxu0
        %v450 = vadd.f32 %v354, %v449
        %v451 = vpop.f32.mrb[0].mxu0
        %452 = vdwg.mxu0
        %453 = vmax.xlane.f32.xlu0 %v439
        %v454 = vpop.xlane.xlu0 %453
        %455 = vmax.xlane.f32.xlu0 %v442
        %v456 = vpop.xlane.xlu0 %455
        %457 = vmax.xlane.f32.xlu0 %v447
        %v458 = vpop.xlane.xlu0 %457
        %459 = vmax.xlane.f32.xlu0 %v450
        %v460 = vpop.xlane.xlu0 %459
        %v461 = vsub.f32 %v439, %v454
        %v462 = vsub.f32 %v442, %v456
        %v463 = vsub.f32 %v447, %v458
        %v464 = vsub.f32 %v450, %v460
        %v465 = vmul.f32 %v461, 1.442695
        %v466 = vpow.pop %v465
        %v467 = vmul.f32 %v462, 1.442695
        %v468 = vpow.pop %v467
        %v469 = vmul.f32 %v463, 1.442695
        %v470 = vpow.pop %v469
        %v471 = vmul.f32 %v464, 1.442695
        %v472 = vpow.pop %v471
        %473 = vadd.xlane.f32.xlu0 %v466
        %v474 = vpop.xlane.xlu0 %473
        %475 = vadd.xlane.f32.xlu0 %v468
        %v476 = vpop.xlane.xlu0 %475
        %477 = vadd.xlane.f32.xlu0 %v470
        %v478 = vpop.xlane.xlu0 %477
        %479 = vadd.xlane.f32.xlu0 %v472
        %v480 = vpop.xlane.xlu0 %479
        %v481 = vrcp.pop %v474
        %v482 = vrcp.pop %v476
        %v483 = vrcp.pop %v478
        %v484 = vrcp.pop %v480
        %v485 = vmul.f32 %v466, %v481
        %v486 = vmul.f32 %v468, %v482
        %v487 = vmul.f32 %v470, %v483
        %v488 = vmul.f32 %v472, %v484
        %489 = vst [vmem:[%s233] sm:$0xff] %v485
        %490 = vst [vmem:[%s233 + $0x8] sm:$0xff] %v486
        %491 = vst [vmem:[%s233 + $0x10] sm:$0xff] %v487
        %492 = vst [vmem:[%s233 + $0x18] sm:$0xff] %v488
        %s493 = sand.u32 %s138, 1
        %s494 = scalar_lea.sflag [#allocation4], %s493
        %s495 = sand.u32 %s138, 1
        %s496 = smul.addr %s495, 32
        %s497 = scalar_lea.vmem [#allocation5], %s496
        // Predicated region
        $region45: #{tpu_custom_call.1} parent=39 // pred_check
          %p498 = pneg %p148
        $region46: #{tpu_custom_call.1} parent=39 // pred_check_branch
          %500 = sbr.rel (%p498) target = $region48
        $region47: #{tpu_custom_call.1} parent=39 // pred_region
          %s501 = smul.u32 4, %s20
          %s503 = ssub.s32 512, 512
          %504 = vsyncadd %s494, %s503
          %s505 = smul.addr %s501, 128
          %s506 = scalar_lea.hbm %s5, %s505
          %s507 = sshll.u32 %s497, 4
          %s508 = int_to_ptr.vmem [resolvable:$true] %s507
          %513 = dma.vmem_to_hbm [thread:$0]  %s508, 512, %s506, %s494, 128, 128, 8
        $region48: #{tpu_custom_call.1} parent=39 // pred_fallthru
          _
      $region40: #{tpu_custom_call.1} parent=5 // pred_fallthru
        _
      %p514 = scmp.le.s32.totalorder 2, %s15
      // Predicated region
      $region49: #{tpu_custom_call.1} parent=5 // pred_check
        %p515 = pneg %p514
      $region50: #{tpu_custom_call.1} parent=5 // pred_check_branch
        %517 = sbr.rel (%p515) target = $region52
      $region51: #{tpu_custom_call.1} parent=5 // pred_region
        %s518 = ssub.s32 %s15, 2
        // Predicated region
        $region53: #{tpu_custom_call.1} parent=51 // pred_check
          %p519 = pneg %p154
        $region54: #{tpu_custom_call.1} parent=51 // pred_check_branch
          %521 = sbr.rel (%p519) target = $region56
        $region55: #{tpu_custom_call.1} parent=51 // pred_region
          %s522 = sand.u32 %s139, 1
          %s523 = scalar_lea.sflag [#allocation4], %s522
          %s524 = sand.u32 %s139, 1
          %s525 = smul.addr %s524, 32
          %s526 = scalar_lea.vmem [#allocation5], %s525
          %527 = dma.done %s523, 512
        $region56: #{tpu_custom_call.1} parent=51 // pred_fallthru
          _
      $region52: #{tpu_custom_call.1} parent=5 // pred_fallthru
        _
    $region6: #{tpu_custom_call.1} parent=1 // loop_footer
      %s19 = sadd.s32 1, %s15
    $region7: #{tpu_custom_call.1} parent=1 // loop_footer_branch
      %14 = sbr.rel target = $region3
    $region8: #{tpu_custom_call.1} parent=1 // loop_exit
      _
    %528 = vsyncpa [#allocation3], 1
    %s529 = scalar_lea.sflag [#allocation3], 1
    %530 = vsyncpa %s529, 1
    %531 = vsyncpa [#allocation4], 1
    %s532 = scalar_lea.sflag [#allocation4], 1
    %533 = vsyncpa %s532, 1

</llo_original>
